<compile_context>
chip_gen: v7x
topology: tpu7x:2x2x1
jax: 0.10.0
libtpu: 0.0.40
codegen_flags: <defaults>
</compile_context>

<pallas_src>
import functools

import jax
import jax.numpy as jnp
from jax.experimental import pallas as pl
from jax.experimental.pallas import tpu as pltpu


def _binary_mask_loss_kernel(x_ref, o_ref, *, tm, valid_rows, ragged):
    # x_ref: (tm, cols) tile in VMEM (native dtype); o_ref: (1, 1, cols) f32.
    # f32 compute path is kept for all chips: v5e's VPU has no bf16, and it
    # preserves exact parity with the torch reference near x == 0.5.
    x = x_ref[...].astype(jnp.float32)
    m = jnp.minimum(x, 1.0 - x)

    if not ragged:
        # Hot path: no masking work at all.
        o_ref[0] = jnp.sum(m, axis=0, keepdims=True)
        return

    i = pl.program_id(0)
    last = pl.num_programs(0) - 1

    @pl.when(i != last)
    def _():
        # Full tiles: plain reduction, no mask on the hot path.
        o_ref[0] = jnp.sum(m, axis=0, keepdims=True)

    @pl.when(i == last)
    def _():
        # Rows past `valid_rows` (only possible in the last tile) hold
        # unspecified data and must be zeroed: min(garbage, 1-garbage) != 0.
        # (tm, 1) sublane iota; jnp.where broadcasts it across lanes.
        limit = valid_rows - i * tm
        row_ids = jax.lax.broadcasted_iota(jnp.int32, (tm, 1), 0)
        mm = jnp.where(row_ids < limit, m, 0.0)
        o_ref[0] = jnp.sum(mm, axis=0, keepdims=True)


def binary_mask_loss(masks: jax.Array, *, target_block_bytes: int = 4 * 1024 * 1024) -> jax.Array:
    """Pallas implementation of BinaryMaskLoss.forward.

    masks: (bs, num_observations, 1, h, w) float array (any float dtype).
    Returns a scalar float32: mean(minimum(masks, 1 - masks)).
    """
    total = 1
    for d in masks.shape:
        total *= int(d)

    flat = masks.reshape(-1)  # native dtype; free for contiguous inputs

    # Pick a lane-dense column count (multiple of 128) that divides the size.
    cols = None
    for c in (1024, 512, 256, 128):
        if total % c == 0:
            cols = c
            break

    tail_sum = jnp.float32(0.0)
    if cols is None:
        # Awkward size: run the kernel on the largest cols-aligned prefix
        # (no padded full-tensor copy) and fold the small tail in plain JAX.
        cols = 1024 if total >= 1024 else 128
        main_total = (total // cols) * cols
        if main_total == 0:
            # Tiny input: kernel not worth launching.
            xf = flat.astype(jnp.float32)
            return jnp.sum(jnp.minimum(xf, 1.0 - xf)) / jnp.float32(total)
        tail = flat[main_total:].astype(jnp.float32)
        tail_sum = jnp.sum(jnp.minimum(tail, 1.0 - tail))
        flat = flat[:main_total]
    else:
        main_total = total

    rows = main_total // cols
    x2d = flat.reshape(rows, cols)

    # --- Byte-based row-tile sizing (portable across v5e/v6e/v7x) ----------
    # ~4 MiB per block regardless of dtype/cols: 2x double-buffered input
    # stays <= 8 MiB, well under every generation's scoped-VMEM limit, while
    # keeping per-grid-step overhead (~0.35 us) negligible.
    itemsize = jnp.dtype(masks.dtype).itemsize
    tm_target = max(8, (target_block_bytes // (cols * itemsize)) // 8 * 8)

    if rows <= tm_target:
        # Single full-extent block along rows: no masking needed, and a block
        # dim equal to the full array dim is always legal.
        tm_eff, ragged = rows, False
    else:
        # Prefer a multiple-of-8 divisor of `rows` near the byte target so
        # ragged handling disappears entirely (>= target/4 keeps blocks >=1 MiB).
        tm_eff, ragged = None, True
        lo = max(8, (tm_target // 4) // 8 * 8)
        cand = tm_target
        while cand >= lo:
            if rows % cand == 0:
                tm_eff, ragged = cand, False
                break
            cand -= 8
        if tm_eff is None:
            tm_eff, ragged = tm_target, True  # mask only the last tile (pl.when)

    num_tiles = pl.cdiv(rows, tm_eff)

    kernel = functools.partial(
        _binary_mask_loss_kernel, tm=tm_eff, valid_rows=rows, ragged=ragged
    )

    partials = pl.pallas_call(
        kernel,
        out_shape=jax.ShapeDtypeStruct((num_tiles, 1, cols), jnp.float32),
        grid_spec=pltpu.PrefetchScalarGridSpec(
            num_scalar_prefetch=0,
            grid=(num_tiles,),
            in_specs=[pl.BlockSpec((tm_eff, cols), lambda i: (i, 0))],
            out_specs=pl.BlockSpec((1, 1, cols), lambda i: (i, 0, 0)),
        ),
        compiler_params=pltpu.CompilerParams(
            # Independent tiles -> both TensorCores can share the grid on v7x.
            dimension_semantics=("parallel",),
            vmem_limit_bytes=32 * 1024 * 1024,
        ),
    )(x2d)

    # Tiny final reduction + divide by the TRUE element count in plain JAX.
    return (jnp.sum(partials, dtype=jnp.float32) + tail_sum) / jnp.float32(total)


def _ref(masks):
    x = masks.astype(jnp.float32)
    return jnp.mean(jnp.minimum(x, 1.0 - x))


if __name__ == "__main__":
    key = jax.random.PRNGKey(0)

    # Primary case: shape implied by the module, f32, divisible by 128.
    bs, n_obs, h, w = 2, 3, 16, 16
    masks = jax.random.uniform(key, (bs, n_obs, 1, h, w), dtype=jnp.float32)
    loss = jax.block_until_ready(binary_mask_loss(masks))
    assert jnp.allclose(loss, _ref(masks), rtol=1e-5, atol=1e-6), (loss, _ref(masks))

    # Multi-tile + ragged-last-tile path (tiny block target forces tiling).
    k2 = jax.random.fold_in(key, 1)
    m2 = jax.random.uniform(k2, (4, 5, 1, 32, 32), dtype=jnp.float32)
    l2 = jax.block_until_ready(binary_mask_loss(m2, target_block_bytes=8 * 1024 * 4))
    assert jnp.allclose(l2, _ref(m2), rtol=1e-5, atol=1e-6), (l2, _ref(m2))

    # Awkward total size (not a multiple of 128): prefix kernel + JAX tail.
    k3 = jax.random.fold_in(key, 2)
    m3 = jax.random.uniform(k3, (2, 3, 1, 17, 19), dtype=jnp.float32)
    l3 = jax.block_until_ready(binary_mask_loss(m3))
    assert jnp.allclose(l3, _ref(m3), rtol=1e-5, atol=1e-6), (l3, _ref(m3))

    print("KERNEL_OK")
</pallas_src>

<mosaic_0001>
module attributes {stable_mosaic.version = 11 : i64} {
  func.func @_binary_mask_loss_kernel(%arg0: i32, %arg1: memref<3x512xf32, #tpu.memory_space<vmem>>, %arg2: memref<1x1x512xf32, #tpu.memory_space<vmem>>) attributes {dimension_semantics = [#tpu.dimension_semantics<parallel>], iteration_bounds = array<i64: 1>, scalar_prefetch = 0 : i64, scratch_operands = 0 : i64, tpu.core_type = #tpu.core_type<tc>, window_params = [{transform_indices = @transform_0, window_bounds = array<i64: 3, 512>}, {transform_indices = @transform_1, window_bounds = array<i64: 1, 1, 512>}]} {
    %c0 = arith.constant 0 : index
    %c0_0 = arith.constant 0 : index
    %0 = vector.load %arg1[%c0, %c0_0] : memref<3x512xf32, #tpu.memory_space<vmem>>, vector<3x512xf32>
    %cst = arith.constant 1.000000e+00 : f32
    %1 = vector.broadcast %cst : f32 to vector<3x512xf32>
    %2 = arith.subf %1, %0 : vector<3x512xf32>
    %3 = arith.minimumf %0, %2 : vector<3x512xf32>
    %cst_1 = arith.constant dense<0.000000e+00> : vector<512xf32>
    %4 = vector.multi_reduction <add>, %3, %cst_1 [0] : vector<3x512xf32> to vector<512xf32>
    %5 = vector.shape_cast %4 : vector<512xf32> to vector<1x512xf32>
    %c0_2 = arith.constant 0 : index
    %c0_3 = arith.constant 0 : index
    %c0_4 = arith.constant 0 : index
    %6 = vector.load %arg2[%c0_2, %c0_3, %c0_4] : memref<1x1x512xf32, #tpu.memory_space<vmem>>, vector<1x1x512xf32>
    %7 = vector.shape_cast %6 : vector<1x1x512xf32> to vector<1x512xf32>
    %8 = vector.shape_cast %5 : vector<1x512xf32> to vector<1x1x512xf32>
    tpu.vector_store %arg2[%c0_2, %c0_3, %c0_4], %8 {strides = array<i32>} : memref<1x1x512xf32, #tpu.memory_space<vmem>>, vector<1x1x512xf32>,
    return
  }
  func.func @transform_0(%arg0: i32) -> (i32, i32) {
    %c0_i32 = arith.constant 0 : i32
    %c0_i32_0 = arith.constant 0 : i32
    return %arg0, %c0_i32 : i32, i32
  }
  func.func @transform_1(%arg0: i32) -> (i32, i32, i32) {
    %c0_i32 = arith.constant 0 : i32
    %c0_i32_0 = arith.constant 0 : i32
    %c0_i32_1 = arith.constant 0 : i32
    return %arg0, %c0_i32, %c0_i32_0 : i32, i32, i32
  }
}

</mosaic_0001>

<llo_original>
// kernel: tpu_custom_call.1
$region0: #{tpu_custom_call.1}
  #allocation0 [shape = 'u32[]', space=smem, size = 0x4, offset = 0x4, fixed_abs, tag = 'smem constant byte address 0x4 - core index']
  #allocation1 [shape = 'u32[144,128]{1,0:T(1,128)}', space=vmem, size = 0x12000, scoped, tag = 'internal scratch']
  %s0 = inlined_call_operand.hbm [shape: f32[3,512], index: 0, kind: input, shape index: {}]
  %s1 = inlined_call_operand.hbm [shape: f32[1,1,512], index: 1, kind: output, shape index: {}]
  %s2 = sld [smem:[#allocation0]]
  $region18: #{tpu_custom_call.1} parent=0
    _
  %s4 = ssub.s32 1, %s2
  %s5 = scalar_select 0, %s4, %s2
  $region1: #{tpu_custom_call.1} parent=0
    #allocation2 [shape = 'u8[8192]{0}', space=vmem, size = 0x2000, scoped, tag = 'input window, operand 0, single buffered']
    #allocation3 [shape = 's32[1]{0}', space=sflag, size = 0x4, scoped, tag = 'scoped memory for tpu_custom_call.1']
    #allocation4 [shape = 's32[1]{0}', space=sflag, size = 0x4, scoped, tag = 'scoped memory for tpu_custom_call.1']
    #allocation5 [shape = 'u8[2048]{0}', space=vmem, size = 0x800, scoped, tag = 'output window, operand 0, single buffered']
    %6 = vsyncpa [#allocation3], 0
    %7 = vsyncpa [#allocation4], 0
    // Predicated region
    $region2: #{tpu_custom_call.1} parent=1 // pred_check
      _
    $region3: #{tpu_custom_call.1} parent=1 // pred_check_branch
      %9 = sbr.rel (0) target = $region5
    $region4: #{tpu_custom_call.1} parent=1 // pred_region
      %s11 = ssub.s32 256, 256
      %12 = vsyncadd [#allocation3], %s11
      %s14 = sshll.u32 [#allocation2], 4
      %s15 = int_to_ptr.vmem [resolvable:$true] %s14
      %17 = dma.hbm_to_vmem [thread:$0]  %s0, 256, %s15, [#allocation3]
    $region5: #{tpu_custom_call.1} parent=1 // pred_fallthru
      _
    // Predicated region
    $region6: #{tpu_custom_call.1} parent=1 // pred_check
      _
    $region7: #{tpu_custom_call.1} parent=1 // pred_check_branch
      %19 = sbr.rel (0) target = $region9
    $region8: #{tpu_custom_call.1} parent=1 // pred_region
      %20 = dma.done [#allocation3], 256
    $region9: #{tpu_custom_call.1} parent=1 // pred_fallthru
      _
    %v21 = vld [vmem:[#allocation2] sm:$0x77]
    %v22 = vld [vmem:[#allocation2 + $0x8] sm:$0x77]
    %v23 = vsub.f32 1.0, %v21
    %v24 = vsub.f32 1.0, %v22
    %v25 = vmin.f32 %v21, %v23
    %v26 = vmin.f32 %v22, %v24
    %v29 = vcombine.high %v25, %v25
    %v30 = vcombine.high %v26, %v26
    %vm33 = vcmask 1042432
    %v34 = vsel %vm33, %v25, 0.0
    %v35 = vrot.slane %v34, 4
    %v36 = vadd.f32 %v34, %v35
    %v37 = vrot.slane %v36, 2
    %v38 = vadd.f32 %v36, %v37
    %v39 = vrot.slane %v38, 1
    %v40 = vadd.f32 %v38, %v39
    %v41 = vsel %vm33, %v29, 0.0
    %v42 = vrot.slane %v41, 4
    %v43 = vadd.f32 %v41, %v42
    %v44 = vrot.slane %v43, 2
    %v45 = vadd.f32 %v43, %v44
    %v46 = vrot.slane %v45, 1
    %v47 = vadd.f32 %v45, %v46
    %v48 = vsel %vm33, %v26, 0.0
    %v49 = vrot.slane %v48, 4
    %v50 = vadd.f32 %v48, %v49
    %v51 = vrot.slane %v50, 2
    %v52 = vadd.f32 %v50, %v51
    %v53 = vrot.slane %v52, 1
    %v54 = vadd.f32 %v52, %v53
    %v55 = vsel %vm33, %v30, 0.0
    %v56 = vrot.slane %v55, 4
    %v57 = vadd.f32 %v55, %v56
    %v58 = vrot.slane %v57, 2
    %v59 = vadd.f32 %v57, %v58
    %v60 = vrot.slane %v59, 1
    %v61 = vadd.f32 %v59, %v60
    %v66 = vcombine.low %v40, %v47
    %v67 = vcombine.low %v54, %v61
    %v69 = vunpack.c.l.s4 1966171168
    %v70 = vunpack.c.0.s8 %v69
    %v71 = vlaneseq
    %v72 = vshrl.u32 %v71, 7
    %v73 = vsub.s32 %v70, %v72
    %v74 = vrot.slane %v66, %v73
    %v76 = vunpack.c.l.s4 1966171168
    %v77 = vunpack.c.0.s8 %v76
    %v78 = vlaneseq
    %v79 = vshrl.u32 %v78, 7
    %v80 = vsub.s32 %v77, %v79
    %v81 = vrot.slane %v67, %v80
    %v82 = vcombine.low %v74, %v81
    %v84 = vunpack.c.l.s4 1966171168
    %v85 = vunpack.c.0.s8 %v84
    %v86 = vlaneseq
    %v87 = vshrl.u32 %v86, 7
    %v88 = vsub.s32 %v85, %v87
    %v89 = vrot.slane %v82, %v88
    %v91 = vlaneseq
    %vm92 = vcmp.ge.s32.totalorder %v91, 0
    %vm93 = vcmp.lt.s32.totalorder %v91, 512
    %vm94 = vmand %vm92, %vm93
    %95 = vst.msk [vmem:[#allocation5] sm:$0xf] %vm94, %v89
    // Predicated region
    $region10: #{tpu_custom_call.1} parent=1 // pred_check
      _
    $region11: #{tpu_custom_call.1} parent=1 // pred_check_branch
      %97 = sbr.rel (0) target = $region13
    $region12: #{tpu_custom_call.1} parent=1 // pred_region
      %s99 = ssub.s32 64, 64
      %100 = vsyncadd [#allocation4], %s99
      %s102 = sshll.u32 [#allocation5], 4
      %s103 = int_to_ptr.vmem [resolvable:$true] %s102
      %105 = dma.vmem_to_hbm [thread:$0]  %s103, 64, %s1, [#allocation4]
    $region13: #{tpu_custom_call.1} parent=1 // pred_fallthru
      _
    // Predicated region
    $region14: #{tpu_custom_call.1} parent=1 // pred_check
      _
    $region15: #{tpu_custom_call.1} parent=1 // pred_check_branch
      %107 = sbr.rel (0) target = $region17
    $region16: #{tpu_custom_call.1} parent=1 // pred_region
      %108 = dma.done [#allocation4], 64
    $region17: #{tpu_custom_call.1} parent=1 // pred_fallthru
      _
    %109 = vsyncpa [#allocation3], 1
    %110 = vsyncpa [#allocation4], 1

</llo_original>
